<compile_context>
chip_gen: v7x
topology: tpu7x:2x2x1
jax: 0.10.0
libtpu: 0.0.40
codegen_flags: <defaults>
</compile_context>

<pallas_src>
import jax
import jax.numpy as jnp
from jax.experimental import pallas as pl
from jax.experimental.pallas import tpu as pltpu


def critic_kernel(x_ref, p_ref, o_ref):
    # x_ref: (tm, 4)   p_ref: (8, 128)   o_ref: (tm, 1)
    x = x_ref[...]
    w1 = p_ref[0:4, :]          # (4, 128)  == torch affine1.weight.T
    b1 = p_ref[4:5, :]          # (1, 128)
    w2 = p_ref[5:6, :]          # (1, 128)  == torch value_head.weight (row)
    b2 = p_ref[6:7, 0:1]        # (1, 1)    scalar bias (broadcasts over rows)

    # hidden = relu(x @ W1 + b1)   (MXU matmul + VPU elementwise)
    h = jnp.dot(x, w1, preferred_element_type=jnp.float32) + b1
    h = jnp.maximum(h, 0.0)

    # value head 128 -> 1: VPU multiply + cross-lane reduce (XLU); no MXU pass.
    v = jnp.sum(h * w2, axis=-1, keepdims=True) + b2      # (tm, 1)

    o_ref[...] = v.astype(o_ref.dtype)                    # narrow (tm, 1) store


def pack_params(w1, b1, w2, b2):
    """Pack all Critic parameters into one (8, 128) slab. Call ONCE at init.

    rows 0-3: W1 as (in, out) = torch affine1.weight.T
    row    4: b1
    row    5: value-head weight (128,) as a row
    row    6: b2 (broadcast; kernel only reads lane 0)
    row    7: zero pad
    """
    b2_arr = jnp.asarray(b2, jnp.float32).reshape(())
    return jnp.concatenate(
        [
            w1.astype(jnp.float32),                      # (4, 128)
            b1.reshape(1, 128).astype(jnp.float32),      # (1, 128)
            w2.reshape(1, 128).astype(jnp.float32),      # (1, 128)
            jnp.full((1, 128), b2_arr, jnp.float32),     # (1, 128)
            jnp.zeros((1, 128), jnp.float32),            # (1, 128)
        ],
        axis=0,
    )


def _choose_tile(batch, max_tile):
    """Pick (tm, padded_b): tm multiple of 8, padded_b multiple of tm."""
    b8 = max(8, ((batch + 7) // 8) * 8)
    if b8 <= max_tile:
        if b8 >= 1024 and b8 % 16 == 0:
            # Large single-tile batch: split into 2 steps so both v7x
            # TensorCores get work under dimension_semantics=("parallel",).
            return b8 // 2, b8
        return b8, b8
    tm = max_tile
    padded_b = ((batch + tm - 1) // tm) * tm
    return tm, padded_b


def critic_forward(x, params, *, max_tile=2048):
    """x: (B, 4) f32 states; params: packed (8, 128) slab from pack_params."""
    B = x.shape[0]
    tm, padded_b = _choose_tile(B, max_tile)

    # Only materialize a padded copy when the batch is ragged w.r.t. the tile.
    if padded_b != B:
        x_in = jnp.zeros((padded_b, 4), x.dtype).at[:B, :].set(x)
    else:
        x_in = x

    out = pl.pallas_call(
        critic_kernel,
        out_shape=jax.ShapeDtypeStruct((padded_b, 1), jnp.float32),
        grid=(padded_b // tm,),
        in_specs=[
            pl.BlockSpec((tm, 4), lambda i: (i, 0)),    # batch-tiled states
            pl.BlockSpec((8, 128), lambda i: (0, 0)),   # params stay resident
        ],
        out_specs=pl.BlockSpec((tm, 1), lambda i: (i, 0)),  # narrow writeback
        compiler_params=pltpu.CompilerParams(
            dimension_semantics=("parallel",)),         # megacore shard on v7x
    )(x_in, params)

    # Padded rows (if any) hold relu(b1)·w2 + b2; slice them off.
    return out[:B]


def init_params(key):
    # Deterministic init mirroring nn.Linear defaults (uniform +-1/sqrt(fan_in)).
    k1, k2, k3, k4 = jax.random.split(key, 4)
    in1, hid = 4, 128
    bound1 = 1.0 / jnp.sqrt(in1)
    bound2 = 1.0 / jnp.sqrt(hid)
    # weights stored as (in, out) = PyTorch weight.T
    w1 = jax.random.uniform(k1, (in1, hid), jnp.float32, -bound1, bound1)
    b1 = jax.random.uniform(k2, (hid,), jnp.float32, -bound1, bound1)
    w2 = jax.random.uniform(k3, (hid,), jnp.float32, -bound2, bound2)   # (128,)
    b2 = jax.random.uniform(k4, (), jnp.float32, -bound2, bound2)       # scalar
    return w1, b1, w2, b2


if __name__ == "__main__":
    key = jax.random.PRNGKey(0)
    kx, kp = jax.random.split(key)

    batch = 8
    x = jax.random.normal(kx, (batch, 4), jnp.float32)  # CartPole-style 4-d state
    w1, b1, w2, b2 = init_params(kp)

    params = pack_params(w1, b1, w2, b2)   # packed once, outside the hot path

    values = critic_forward(x, params)
    jax.block_until_ready(values)

    # reference check in plain JAX (matches PyTorch Critic.forward)
    h_ref = jnp.maximum(x @ w1 + b1[None, :], 0.0)
    v_ref = h_ref @ w2[:, None] + b2
    assert values.shape == (batch, 1)
    assert jnp.allclose(values, v_ref, atol=1e-5), "mismatch vs reference"

    print("KERNEL_OK")
</pallas_src>

<mosaic_0001>
module attributes {stable_mosaic.version = 11 : i64} {
  func.func @critic_kernel(%arg0: i32, %arg1: memref<8x4xf32, #tpu.memory_space<vmem>>, %arg2: memref<8x128xf32, #tpu.memory_space<vmem>>, %arg3: memref<8x1xf32, #tpu.memory_space<vmem>>) attributes {dimension_semantics = [#tpu.dimension_semantics<parallel>], iteration_bounds = array<i64: 1>, scalar_prefetch = 0 : i64, scratch_operands = 0 : i64, tpu.core_type = #tpu.core_type<tc>, window_params = [{transform_indices = @transform_0, window_bounds = array<i64: 8, 4>}, {pipeline_mode = #tpu.pipeline_mode<synchronous>, transform_indices = @transform_1, window_bounds = array<i64: 8, 128>}, {transform_indices = @transform_2, window_bounds = array<i64: 8, 1>}]} {
    %c0 = arith.constant 0 : index
    %c0_0 = arith.constant 0 : index
    %0 = vector.load %arg1[%c0, %c0_0] : memref<8x4xf32, #tpu.memory_space<vmem>>, vector<8x4xf32>
    %c0_1 = arith.constant 0 : index
    %c0_2 = arith.constant 0 : index
    %1 = vector.load %arg2[%c0_1, %c0_2] : memref<8x128xf32, #tpu.memory_space<vmem>>, vector<4x128xf32>
    %c4 = arith.constant 4 : index
    %c0_3 = arith.constant 0 : index
    %2 = vector.load %arg2[%c4, %c0_3] : memref<8x128xf32, #tpu.memory_space<vmem>>, vector<1x128xf32>
    %c5 = arith.constant 5 : index
    %c0_4 = arith.constant 0 : index
    %3 = vector.load %arg2[%c5, %c0_4] : memref<8x128xf32, #tpu.memory_space<vmem>>, vector<1x128xf32>
    %c6 = arith.constant 6 : index
    %c0_5 = arith.constant 0 : index
    %4 = vector.load %arg2[%c6, %c0_5] : memref<8x128xf32, #tpu.memory_space<vmem>>, vector<1x1xf32>
    %cst = arith.constant dense<0.000000e+00> : vector<8x128xf32>
    %5 = tpu.matmul %0, %1, %cst {dimension_numbers = #tpu.dot_dimension_numbers<[1], [0], [0], [1], [0, 0, 1, 1], [], []>} : vector<8x4xf32>, vector<4x128xf32>, vector<8x128xf32> -> vector<8x128xf32>
    %6 = vector.broadcast %2 : vector<1x128xf32> to vector<8x128xf32>
    %7 = arith.addf %5, %6 : vector<8x128xf32>
    %cst_6 = arith.constant 0.000000e+00 : f32
    %8 = vector.broadcast %cst_6 : f32 to vector<8x128xf32>
    %9 = arith.maximumf %7, %8 : vector<8x128xf32>
    %10 = vector.broadcast %3 : vector<1x128xf32> to vector<8x128xf32>
    %11 = arith.mulf %9, %10 : vector<8x128xf32>
    %cst_7 = arith.constant dense<0.000000e+00> : vector<8xf32>
    %12 = vector.multi_reduction <add>, %11, %cst_7 [1] : vector<8x128xf32> to vector<8xf32>
    %13 = vector.shape_cast %12 : vector<8xf32> to vector<8x1xf32>
    %14 = vector.broadcast %4 : vector<1x1xf32> to vector<8x1xf32>
    %15 = arith.addf %13, %14 : vector<8x1xf32>
    %c0_8 = arith.constant 0 : index
    %c0_9 = arith.constant 0 : index
    %16 = vector.load %arg3[%c0_8, %c0_9] : memref<8x1xf32, #tpu.memory_space<vmem>>, vector<8x1xf32>
    tpu.vector_store %arg3[%c0_8, %c0_9], %15 {strides = array<i32>} : memref<8x1xf32, #tpu.memory_space<vmem>>, vector<8x1xf32>,
    return
  }
  func.func @transform_0(%arg0: i32) -> (i32, i32) {
    %c0_i32 = arith.constant 0 : i32
    %c0_i32_0 = arith.constant 0 : i32
    return %arg0, %c0_i32 : i32, i32
  }
  func.func @transform_1(%arg0: i32) -> (i32, i32) {
    %c0_i32 = arith.constant 0 : i32
    %c0_i32_0 = arith.constant 0 : i32
    %c0_i32_1 = arith.constant 0 : i32
    return %c0_i32, %c0_i32_0 : i32, i32
  }
  func.func @transform_2(%arg0: i32) -> (i32, i32) {
    %c0_i32 = arith.constant 0 : i32
    %c0_i32_0 = arith.constant 0 : i32
    return %arg0, %c0_i32 : i32, i32
  }
}

</mosaic_0001>

<llo_original>
// kernel: tpu_custom_call.1
$region0: #{tpu_custom_call.1}
  #allocation0 [shape = 'u32[]', space=smem, size = 0x4, offset = 0x4, fixed_abs, tag = 'smem constant byte address 0x4 - core index']
  #allocation1 [shape = 'u32[144,128]{1,0:T(1,128)}', space=vmem, size = 0x12000, scoped, tag = 'internal scratch']
  %s0 = inlined_call_operand.vmem [shape: f32[8,4], index: 0, kind: input, shape index: {}]
  %s1 = inlined_call_operand.vmem [shape: f32[8,128], index: 1, kind: input, shape index: {}]
  %s2 = inlined_call_operand.vmem [shape: f32[8,1], index: 2, kind: output, shape index: {}]
  %s3 = sld [smem:[#allocation0]]
  $region18: #{tpu_custom_call.1} parent=0
    _
  %s5 = ssub.s32 1, %s3
  %s6 = scalar_select 0, %s5, %s3
  // Predicated region
  $region2: #{tpu_custom_call.1} parent=0 // pred_check
    _
  $region3: #{tpu_custom_call.1} parent=0 // pred_check_branch
    %8 = sbr.rel (0) target = $region5
  $region4: #{tpu_custom_call.1} parent=0 // pred_region
    _
  $region5: #{tpu_custom_call.1} parent=0 // pred_fallthru
    _
  // Predicated region
  $region6: #{tpu_custom_call.1} parent=0 // pred_check
    _
  $region7: #{tpu_custom_call.1} parent=0 // pred_check_branch
    %10 = sbr.rel (0) target = $region9
  $region8: #{tpu_custom_call.1} parent=0 // pred_region
    _
  $region9: #{tpu_custom_call.1} parent=0 // pred_fallthru
    _
  %v11 = vld [vmem:[%s0] sm:$0xff]
  %v12 = vld [vmem:[%s1] sm:$0xf]
  %v13 = vld [vmem:[%s1 + $0x4] sm:$0x1]
  %v14 = vld [vmem:[%s1 + $0x5] sm:$0x1]
  %v15 = vld [vmem:[%s1 + $0x6] sm:$0x1]
  %v16 = vlaneseq
  %v17 = vshrl.u32 %v16, 7
  %v18 = vsub.s32 0, %v17
  %v19 = vrot.slane %v13, %v18
  %vm20 = vcmask 31744
  %v22 = vsel %vm20, %v11, 0
  %vm24 = vcmask 1043456
  %v26 = vsel %vm24, %v12, 0
  %28 = vmatprep.subr.mxu0 0.0
  %29 = vmatpush1.msra.mxu0 %v26
  %30 = vmatprep.subr.mxu0 0.0
  %31 = vmatpush1.msra.mxu0 0.0
  %32 = vmatprep.subr.mxu0 0.0
  %33 = vmatpush1.msra.mxu0 0.0
  %34 = vmatprep.subr.mxu0 0.0
  %35 = vmatpush1.msra.mxu0 0.0
  %36 = vmatprep.subr.mxu0 0.0
  %37 = vmatpush1.msra.mxu0 0.0
  %38 = vmatprep.subr.mxu0 0.0
  %39 = vmatpush1.msra.mxu0 0.0
  %40 = vmatprep.subr.mxu0 0.0
  %41 = vmatpush1.msra.mxu0 0.0
  %42 = vmatprep.subr.mxu0 0.0
  %43 = vmatpush1.msra.mxu0 0.0
  %44 = vmatprep.subr.mxu0 0.0
  %45 = vmatpush1.msra.mxu0 0.0
  %46 = vmatprep.subr.mxu0 0.0
  %47 = vmatpush1.msra.mxu0 0.0
  %48 = vmatprep.subr.mxu0 0.0
  %49 = vmatpush1.msra.mxu0 0.0
  %50 = vmatprep.subr.mxu0 0.0
  %51 = vmatpush1.msra.mxu0 0.0
  %52 = vmatprep.subr.mxu0 0.0
  %53 = vmatpush1.msra.mxu0 0.0
  %54 = vmatprep.subr.mxu0 0.0
  %55 = vmatpush1.msra.mxu0 0.0
  %56 = vmatprep.subr.mxu0 0.0
  %57 = vmatpush1.msra.mxu0 0.0
  %58 = vmatprep.subr.mxu0 0.0
  %59 = vmatpush1.msra.mxu0 0.0
  %60 = vmatprep.subr.mxu0 0.0
  %61 = vmatpush1.msra.mxu0 0.0
  %62 = vmatprep.subr.mxu0 0.0
  %63 = vmatpush1.msra.mxu0 0.0
  %64 = vmatprep.subr.mxu0 0.0
  %65 = vmatpush1.msra.mxu0 0.0
  %66 = vmatprep.subr.mxu0 0.0
  %67 = vmatpush1.msra.mxu0 0.0
  %68 = vmatprep.subr.mxu0 0.0
  %69 = vmatpush1.msra.mxu0 0.0
  %70 = vmatprep.subr.mxu0 0.0
  %71 = vmatpush1.msra.mxu0 0.0
  %72 = vmatprep.subr.mxu0 0.0
  %73 = vmatpush1.msra.mxu0 0.0
  %74 = vmatprep.subr.mxu0 0.0
  %75 = vmatpush1.msra.mxu0 0.0
  %76 = vmatprep.subr.mxu0 0.0
  %77 = vmatpush1.msra.mxu0 0.0
  %78 = vmatprep.subr.mxu0 0.0
  %79 = vmatpush1.msra.mxu0 0.0
  %80 = vmatprep.subr.mxu0 0.0
  %81 = vmatpush1.msra.mxu0 0.0
  %82 = vmatprep.subr.mxu0 0.0
  %83 = vmatpush1.msra.mxu0 0.0
  %84 = vmatprep.subr.mxu0 0.0
  %85 = vmatpush1.msra.mxu0 0.0
  %86 = vmatprep.subr.mxu0 0.0
  %87 = vmatpush1.msra.mxu0 0.0
  %88 = vmatprep.subr.mxu0 0.0
  %89 = vmatpush1.msra.mxu0 0.0
  %90 = vmatprep.subr.mxu0 0.0
  %91 = vmatpush1.msra.mxu0 0.0
  %92 = vmatprep.mubr.f32.mxu0 0.0
  %93 = vmatmul.mubr.f32.gmra.mrb[0].mxu0 %v22
  %v94 = vpop.f32.mrb[0].mxu0
  %v95 = vadd.f32 %v19, %v94
  %v96 = vpop.f32.mrb[0].mxu0
  %97 = vdwg.mxu0
  %v98 = vmax.f32 %v95, 0.0
  %v99 = vlaneseq
  %v100 = vshrl.u32 %v99, 7
  %v101 = vsub.s32 0, %v100
  %v102 = vrot.slane %v14, %v101
  %v103 = vmul.f32 %v98, %v102
  %104 = vadd.xlane.f32.xlu0 %v103
  %v105 = vpop.xlane.xlu0 %104
  %v106 = vlaneseq
  %v107 = vshrl.u32 %v106, 7
  %v108 = vsub.s32 0, %v107
  %v109 = vrot.slane %v15, %v108
  %v110 = vadd.f32 %v105, %v109
  %vm111 = vcmask 7168
  %112 = vst.msk [vmem:[%s2] sm:$0xff] %vm111, %v110
  // Predicated region
  $region10: #{tpu_custom_call.1} parent=0 // pred_check
    _
  $region11: #{tpu_custom_call.1} parent=0 // pred_check_branch
    %114 = sbr.rel (0) target = $region13
  $region12: #{tpu_custom_call.1} parent=0 // pred_region
    _
  $region13: #{tpu_custom_call.1} parent=0 // pred_fallthru
    _
  // Predicated region
  $region14: #{tpu_custom_call.1} parent=0 // pred_check
    _
  $region15: #{tpu_custom_call.1} parent=0 // pred_check_branch
    %116 = sbr.rel (0) target = $region17
  $region16: #{tpu_custom_call.1} parent=0 // pred_region
    _
  $region17: #{tpu_custom_call.1} parent=0 // pred_fallthru
    _

</llo_original>
